<compile_context>
chip_gen: v5e
topology: v5e:2x2
jax: 0.10.0
libtpu: 0.0.40
codegen_flags: <defaults>
</compile_context>

<pallas_src>
import functools

import jax
import jax.numpy as jnp
import numpy as np
from jax.experimental import pallas as pl
from jax.experimental.pallas import tpu as pltpu

# ----------------------------- static config ------------------------------
BATCH = 2
SEQ = 8
HIDDEN = 32
INTERMEDIATE = 128          # 4x expansion; multiple of 128 -> lane-aligned
DTYPE = jnp.float32

# Minimal ACT2FN equivalent (DiffBert's SwiGLU FFN uses 'silu').
ACT2FN = {
    "silu": jax.nn.silu,
    "gelu": jax.nn.gelu,
    "relu": jax.nn.relu,
}


# ------------------------------ Pallas kernel ------------------------------
def _swiglu_ffn_kernel(x_ref, w_gate_ref, w_up_ref, w_down_ref, out_ref, *, act_fn):
    """Fused SwiGLU FFN over all N = B*S rows; everything resident in VMEM.

    x_ref:      (N, H)   activations
    w_gate_ref: (H, I)   gate_proj weight, pre-transposed to (in, out)
    w_up_ref:   (H, I)   up_proj weight,   pre-transposed to (in, out)
    w_down_ref: (I, H)   down_proj weight, pre-transposed to (in, out)
    out_ref:    (N, H)
    """
    x = x_ref[...]                                                         # (N, H)
    gate = jnp.dot(x, w_gate_ref[...], preferred_element_type=jnp.float32)  # (N, I)
    up = jnp.dot(x, w_up_ref[...], preferred_element_type=jnp.float32)      # (N, I)
    hidden = act_fn(gate) * up                                             # (N, I)
    out_ref[...] = jnp.dot(hidden, w_down_ref[...],
                           preferred_element_type=jnp.float32).astype(out_ref.dtype)


# -------------------------------- wrapper -----------------------------------
def diffbert_intermediate(hidden_states, params, hidden_act="silu"):
    """hidden_states: (B, S, H).

    params: gate_proj (H, I), up_proj (H, I), down_proj (I, H) -- all stored
    pre-transposed as (in, out) so the kernel computes y = x @ W (equivalent to
    nn.Linear with bias=False, whose weight is stored (out, in)).
    """
    if hidden_act not in ACT2FN:
        raise ValueError(f"unsupported hidden_act: {hidden_act!r}")
    act_fn = ACT2FN[hidden_act]

    B, S, H = hidden_states.shape
    N = B * S
    I = params["down_proj"].shape[0]
    x2d = hidden_states.reshape(N, H)      # free reshape; H stays the lane dim

    flops = 2 * N * H * I * 2 + 2 * N * I * H           # gate + up + down matmuls
    transcendentals = N * I                               # sigmoid in SiLU
    bytes_accessed = 4 * (N * H + 2 * H * I + I * H + N * H)

    vmem = pl.BlockSpec(memory_space=pltpu.MemorySpace.VMEM)
    out2d = pl.pallas_call(
        functools.partial(_swiglu_ffn_kernel, act_fn=act_fn),
        out_shape=jax.ShapeDtypeStruct((N, H), hidden_states.dtype),
        in_specs=[vmem, vmem, vmem, vmem],   # whole operands in VMEM, no grid
        out_specs=vmem,
        cost_estimate=pl.CostEstimate(flops=flops,
                                      transcendentals=transcendentals,
                                      bytes_accessed=bytes_accessed),
    )(x2d, params["gate_proj"], params["up_proj"], params["down_proj"])

    return out2d.reshape(B, S, H)


# --------------------------- pure-JAX reference -----------------------------
def diffbert_intermediate_ref(x, p, hidden_act="silu"):
    hp = jax.lax.Precision.HIGHEST
    gate = jnp.einsum("bsh,hi->bsi", x, p["gate_proj"], precision=hp)
    up = jnp.einsum("bsh,hi->bsi", x, p["up_proj"], precision=hp)
    inter = ACT2FN[hidden_act](gate) * up
    return jnp.einsum("bsi,ih->bsh", inter, p["down_proj"], precision=hp)


# ---------------------------------- main ------------------------------------
if __name__ == "__main__":
    key = jax.random.PRNGKey(0)
    k_g, k_u, k_d, k_x = jax.random.split(key, 4)

    # nn.Linear-style init (scaled by 1/sqrt(fan_in)), stored pre-transposed
    # (in, out) once at parameter-creation time (no per-call weight reshuffle).
    params = {
        "gate_proj": (jax.random.normal(k_g, (HIDDEN, INTERMEDIATE)) /
                      jnp.sqrt(HIDDEN)).astype(DTYPE),
        "up_proj": (jax.random.normal(k_u, (HIDDEN, INTERMEDIATE)) /
                    jnp.sqrt(HIDDEN)).astype(DTYPE),
        "down_proj": (jax.random.normal(k_d, (INTERMEDIATE, HIDDEN)) /
                      jnp.sqrt(INTERMEDIATE)).astype(DTYPE),
    }
    hidden_states = jax.random.normal(k_x, (BATCH, SEQ, HIDDEN)).astype(DTYPE)

    out = diffbert_intermediate(hidden_states, params, hidden_act="silu")
    out = jax.block_until_ready(out)

    ref = diffbert_intermediate_ref(hidden_states, params, hidden_act="silu")
    np.testing.assert_allclose(np.asarray(out), np.asarray(ref), rtol=1e-3, atol=1e-3)

    # TODO(synk): config.hidden_act is assumed 'silu'; other ACT2FN entries are
    # supported via the ACT2FN map above but only 'silu' is exercised here.
    print("KERNEL_OK")
</pallas_src>

<mosaic_0001>
module attributes {stable_mosaic.version = 11 : i64} {
  func.func @_swiglu_ffn_kernel(%arg0: memref<16x32xf32, #tpu.memory_space<vmem>>, %arg1: memref<32x128xf32, #tpu.memory_space<vmem>>, %arg2: memref<32x128xf32, #tpu.memory_space<vmem>>, %arg3: memref<128x32xf32, #tpu.memory_space<vmem>>, %arg4: memref<16x32xf32, #tpu.memory_space<vmem>>) attributes {dimension_semantics = [], scalar_prefetch = 0 : i64, scratch_operands = 0 : i64, tpu.core_type = #tpu.core_type<tc>} {
    %c0 = arith.constant 0 : index
    %c0_0 = arith.constant 0 : index
    %0 = vector.load %arg0[%c0, %c0_0] : memref<16x32xf32, #tpu.memory_space<vmem>>, vector<16x32xf32>
    %c0_1 = arith.constant 0 : index
    %c0_2 = arith.constant 0 : index
    %1 = vector.load %arg1[%c0_1, %c0_2] : memref<32x128xf32, #tpu.memory_space<vmem>>, vector<32x128xf32>
    %cst = arith.constant dense<0.000000e+00> : vector<16x128xf32>
    %2 = tpu.matmul %0, %1, %cst {dimension_numbers = #tpu.dot_dimension_numbers<[1], [0], [0], [1], [0, 0, 1, 1], [], []>} : vector<16x32xf32>, vector<32x128xf32>, vector<16x128xf32> -> vector<16x128xf32>
    %c0_3 = arith.constant 0 : index
    %c0_4 = arith.constant 0 : index
    %3 = vector.load %arg2[%c0_3, %c0_4] : memref<32x128xf32, #tpu.memory_space<vmem>>, vector<32x128xf32>
    %cst_5 = arith.constant dense<0.000000e+00> : vector<16x128xf32>
    %4 = tpu.matmul %0, %3, %cst_5 {dimension_numbers = #tpu.dot_dimension_numbers<[1], [0], [0], [1], [0, 0, 1, 1], [], []>} : vector<16x32xf32>, vector<32x128xf32>, vector<16x128xf32> -> vector<16x128xf32>
    %5 = arith.negf %2 : vector<16x128xf32>
    %6 = math.exp %5 : vector<16x128xf32>
    %cst_6 = arith.constant 1.000000e+00 : f32
    %7 = vector.broadcast %cst_6 : f32 to vector<16x128xf32>
    %8 = arith.addf %7, %6 : vector<16x128xf32>
    %9 = arith.divf %7, %8 : vector<16x128xf32>
    %10 = arith.mulf %2, %9 : vector<16x128xf32>
    %11 = arith.mulf %10, %4 : vector<16x128xf32>
    %c0_7 = arith.constant 0 : index
    %c0_8 = arith.constant 0 : index
    %12 = vector.load %arg3[%c0_7, %c0_8] : memref<128x32xf32, #tpu.memory_space<vmem>>, vector<128x32xf32>
    %cst_9 = arith.constant dense<0.000000e+00> : vector<16x32xf32>
    %13 = tpu.matmul %11, %12, %cst_9 {dimension_numbers = #tpu.dot_dimension_numbers<[1], [0], [0], [1], [0, 0, 1, 1], [], []>} : vector<16x128xf32>, vector<128x32xf32>, vector<16x32xf32> -> vector<16x32xf32>
    %c0_10 = arith.constant 0 : index
    %c0_11 = arith.constant 0 : index
    %14 = vector.load %arg4[%c0_10, %c0_11] : memref<16x32xf32, #tpu.memory_space<vmem>>, vector<16x32xf32>
    tpu.vector_store %arg4[%c0_10, %c0_11], %13 {strides = array<i32>} : memref<16x32xf32, #tpu.memory_space<vmem>>, vector<16x32xf32>,
    return
  }
}

</mosaic_0001>

<llo_original>
// kernel: tpu_custom_call.1
$region0: #{tpu_custom_call.1}
  #allocation0 [shape = 'u32[]', space=smem, size = 0x4, offset = 0x4, fixed_abs, tag = 'smem constant byte address 0x4 - core index']
  #allocation1 [shape = 'u32[72,128]{1,0:T(1,128)}', space=vmem, size = 0x9000, scoped, tag = 'internal scratch']
  %s0 = inlined_call_operand.vmem [shape: f32[16,32], index: 0, kind: input, shape index: {}]
  %s1 = inlined_call_operand.vmem [shape: f32[32,128], index: 1, kind: input, shape index: {}]
  %s2 = inlined_call_operand.vmem [shape: f32[32,128], index: 2, kind: input, shape index: {}]
  %s3 = inlined_call_operand.vmem [shape: f32[128,32], index: 3, kind: input, shape index: {}]
  %s4 = inlined_call_operand.hbm [shape: f32[16,32], index: 4, kind: output, shape index: {}]
  %s5 = sld [smem:[#allocation0]]
  $region26: #{tpu_custom_call.1} parent=0
    _
  %s7 = ssub.s32 1, %s5
  %s8 = scalar_select 0, %s7, %s5
  $region1: #{tpu_custom_call.1} parent=0
    #allocation2 [shape = 'u8[8192]{0}', space=vmem, size = 0x2000, scoped, tag = 'output window, operand 0, single buffered']
    #allocation3 [shape = 's32[1]{0}', space=sflag, size = 0x4, scoped, tag = 'scoped memory for tpu_custom_call.1']
    %9 = vsyncpa [#allocation3], 0
    // Predicated region
    $region2: #{tpu_custom_call.1} parent=1 // pred_check
      _
    $region3: #{tpu_custom_call.1} parent=1 // pred_check_branch
      %11 = sbr.rel (0) target = $region5
    $region4: #{tpu_custom_call.1} parent=1 // pred_region
      _
    $region5: #{tpu_custom_call.1} parent=1 // pred_fallthru
      _
    // Predicated region
    $region6: #{tpu_custom_call.1} parent=1 // pred_check
      _
    $region7: #{tpu_custom_call.1} parent=1 // pred_check_branch
      %13 = sbr.rel (0) target = $region9
    $region8: #{tpu_custom_call.1} parent=1 // pred_region
      _
    $region9: #{tpu_custom_call.1} parent=1 // pred_fallthru
      _
    // Predicated region
    $region10: #{tpu_custom_call.1} parent=1 // pred_check
      _
    $region11: #{tpu_custom_call.1} parent=1 // pred_check_branch
      %15 = sbr.rel (0) target = $region13
    $region12: #{tpu_custom_call.1} parent=1 // pred_region
      _
    $region13: #{tpu_custom_call.1} parent=1 // pred_fallthru
      _
    // Predicated region
    $region14: #{tpu_custom_call.1} parent=1 // pred_check
      _
    $region15: #{tpu_custom_call.1} parent=1 // pred_check_branch
      %17 = sbr.rel (0) target = $region17
    $region16: #{tpu_custom_call.1} parent=1 // pred_region
      _
    $region17: #{tpu_custom_call.1} parent=1 // pred_fallthru
      _
    %v18 = vld [vmem:[%s0] sm:$0xff]
    %v19 = vld [vmem:[%s0 + $0x8] sm:$0xff]
    %v20 = vld [vmem:[%s1] sm:$0xff]
    %v21 = vld [vmem:[%s1 + $0x8] sm:$0xff]
    %v22 = vld [vmem:[%s1 + $0x10] sm:$0xff]
    %v23 = vld [vmem:[%s1 + $0x18] sm:$0xff]
    %vm24 = vcmask 261120
    %v26 = vsel %vm24, %v18, 0
    %v29 = vsel %vm24, %v19, 0
    %31 = vmatpush.msra.mxu0 0.0
    %32 = vmatpush.msra.mxu0 0.0
    %33 = vmatpush.msra.mxu0 0.0
    %34 = vmatpush.msra.mxu0 0.0
    %35 = vmatpush.msra.mxu0 0.0
    %36 = vmatpush.msra.mxu0 0.0
    %37 = vmatpush.msra.mxu0 0.0
    %38 = vmatpush.msra.mxu0 0.0
    %39 = vmatpush.msra.mxu0 0.0
    %40 = vmatpush.msra.mxu0 0.0
    %41 = vmatpush.msra.mxu0 0.0
    %42 = vmatpush.msra.mxu0 0.0
    %43 = vmatpush.msra.mxu0 %v23
    %44 = vmatpush.msra.mxu0 %v22
    %45 = vmatpush.msra.mxu0 %v21
    %46 = vmatpush.msra.mxu0 %v20
    %47 = vmatmul.f32.gmra.mxu0 %v26
    %v48 = vpop.f32.mrf.mxu0
    %v49 = vadd.f32 0.0, %v48
    %50 = vmatmul.f32.gmra.mxu0 %v29
    %v51 = vpop.f32.mrf.mxu0
    %v52 = vadd.f32 0.0, %v51
    %53 = vdwg.mxu0
    %v54 = vld [vmem:[%s2] sm:$0xff]
    %v55 = vld [vmem:[%s2 + $0x8] sm:$0xff]
    %v56 = vld [vmem:[%s2 + $0x10] sm:$0xff]
    %v57 = vld [vmem:[%s2 + $0x18] sm:$0xff]
    %58 = vmatpush.msra.mxu0 0.0
    %59 = vmatpush.msra.mxu0 0.0
    %60 = vmatpush.msra.mxu0 0.0
    %61 = vmatpush.msra.mxu0 0.0
    %62 = vmatpush.msra.mxu0 0.0
    %63 = vmatpush.msra.mxu0 0.0
    %64 = vmatpush.msra.mxu0 0.0
    %65 = vmatpush.msra.mxu0 0.0
    %66 = vmatpush.msra.mxu0 0.0
    %67 = vmatpush.msra.mxu0 0.0
    %68 = vmatpush.msra.mxu0 0.0
    %69 = vmatpush.msra.mxu0 0.0
    %70 = vmatpush.msra.mxu0 %v57
    %71 = vmatpush.msra.mxu0 %v56
    %72 = vmatpush.msra.mxu0 %v55
    %73 = vmatpush.msra.mxu0 %v54
    %74 = vmatmul.f32.gmra.mxu0 %v26
    %v75 = vpop.f32.mrf.mxu0
    %v76 = vadd.f32 0.0, %v75
    %77 = vmatmul.f32.gmra.mxu0 %v29
    %v78 = vpop.f32.mrf.mxu0
    %v79 = vadd.f32 0.0, %v78
    %80 = vdwg.mxu0
    %v81 = vxor.u32 %v49, 2147483648
    %v82 = vxor.u32 %v52, 2147483648
    %v83 = vmul.f32 %v81, 1.442695
    %v84 = vpow.pop %v83
    %v85 = vmul.f32 %v82, 1.442695
    %v86 = vpow.pop %v85
    %v87 = vadd.f32 %v84, 1.0
    %v88 = vadd.f32 %v86, 1.0
    %v89 = vrcp.pop %v87
    %v90 = vmul.f32 %v87, %v89
    %v91 = vsub.f32 1.0, %v90
    %v92 = vmul.f32 %v89, %v91
    %v93 = vadd.f32 %v89, %v92
    %vm94 = vweird.f32 %v87
    %vm95 = vweird.f32 %v89
    %vm96 = vmor %vm94, %vm95
    %v97 = vsel %vm96, %v89, %v93
    %v98 = vand.u32 2147483647, %v87
    %vm99 = vcmp.eq.f32.partialorder %v98, 8.507059e+37
    %v100 = vand.u32 %v87, 2147483648
    %v101 = vor.u32 1.1754944e-38, %v100
    %v102 = vsel %vm99, %v101, %v97
    %v103 = vmul.f32 1.0, %v102
    %v104 = vrcp.pop %v88
    %v105 = vmul.f32 %v88, %v104
    %v106 = vsub.f32 1.0, %v105
    %v107 = vmul.f32 %v104, %v106
    %v108 = vadd.f32 %v104, %v107
    %vm109 = vweird.f32 %v88
    %vm110 = vweird.f32 %v104
    %vm111 = vmor %vm109, %vm110
    %v112 = vsel %vm111, %v104, %v108
    %v113 = vand.u32 2147483647, %v88
    %vm114 = vcmp.eq.f32.partialorder %v113, 8.507059e+37
    %v115 = vand.u32 %v88, 2147483648
    %v116 = vor.u32 1.1754944e-38, %v115
    %v117 = vsel %vm114, %v116, %v112
    %v118 = vmul.f32 1.0, %v117
    %v119 = vmul.f32 %v49, %v103
    %v120 = vmul.f32 %v52, %v118
    %v121 = vmul.f32 %v119, %v76
    %v122 = vmul.f32 %v120, %v79
    %v123 = vld [vmem:[%s3] sm:$0xff]
    %v124 = vld [vmem:[%s3 + $0x8] sm:$0xff]
    %v125 = vld [vmem:[%s3 + $0x10] sm:$0xff]
    %v126 = vld [vmem:[%s3 + $0x18] sm:$0xff]
    %v127 = vld [vmem:[%s3 + $0x20] sm:$0xff]
    %v128 = vld [vmem:[%s3 + $0x28] sm:$0xff]
    %v129 = vld [vmem:[%s3 + $0x30] sm:$0xff]
    %v130 = vld [vmem:[%s3 + $0x38] sm:$0xff]
    %v131 = vld [vmem:[%s3 + $0x40] sm:$0xff]
    %v132 = vld [vmem:[%s3 + $0x48] sm:$0xff]
    %v133 = vld [vmem:[%s3 + $0x50] sm:$0xff]
    %v134 = vld [vmem:[%s3 + $0x58] sm:$0xff]
    %v135 = vld [vmem:[%s3 + $0x60] sm:$0xff]
    %v136 = vld [vmem:[%s3 + $0x68] sm:$0xff]
    %v137 = vld [vmem:[%s3 + $0x70] sm:$0xff]
    %v138 = vld [vmem:[%s3 + $0x78] sm:$0xff]
    %139 = vmatpush.msra.mxu0 %v138
    %140 = vmatpush.msra.mxu0 %v137
    %141 = vmatpush.msra.mxu0 %v136
    %142 = vmatpush.msra.mxu0 %v135
    %143 = vmatpush.msra.mxu0 %v134
    %144 = vmatpush.msra.mxu0 %v133
    %145 = vmatpush.msra.mxu0 %v132
    %146 = vmatpush.msra.mxu0 %v131
    %147 = vmatpush.msra.mxu0 %v130
    %148 = vmatpush.msra.mxu0 %v129
    %149 = vmatpush.msra.mxu0 %v128
    %150 = vmatpush.msra.mxu0 %v127
    %151 = vmatpush.msra.mxu0 %v126
    %152 = vmatpush.msra.mxu0 %v125
    %153 = vmatpush.msra.mxu0 %v124
    %154 = vmatpush.msra.mxu0 %v123
    %155 = vmatmul.f32.gmra.mxu0 %v121
    %v156 = vpop.f32.mrf.mxu0
    %v157 = vadd.f32 0.0, %v156
    %158 = vmatmul.f32.gmra.mxu0 %v122
    %v159 = vpop.f32.mrf.mxu0
    %v160 = vadd.f32 0.0, %v159
    %161 = vdwg.mxu0
    %162 = vst.msk [vmem:[#allocation2] sm:$0xff] %vm24, %v157
    %163 = vst.msk [vmem:[#allocation2 + $0x8] sm:$0xff] %vm24, %v160
    // Predicated region
    $region18: #{tpu_custom_call.1} parent=1 // pred_check
      _
    $region19: #{tpu_custom_call.1} parent=1 // pred_check_branch
      %165 = sbr.rel (0) target = $region21
    $region20: #{tpu_custom_call.1} parent=1 // pred_region
      %167 = vsyncadd [#allocation3], 0
      %s168 = sshll.u32 [#allocation2], 4
      %s169 = int_to_ptr.vmem [resolvable:$true] %s168
      %s170 = sshll.u32 %s4, 4
      %s171 = int_to_ptr.hbm [resolvable:$true] %s170
      %176 = dma.vmem_to_hbm [thread:$0]  %s169, 256, %s171, [#allocation3], 128, 128, 8
    $region21: #{tpu_custom_call.1} parent=1 // pred_fallthru
      _
    // Predicated region
    $region22: #{tpu_custom_call.1} parent=1 // pred_check
      _
    $region23: #{tpu_custom_call.1} parent=1 // pred_check_branch
      %178 = sbr.rel (0) target = $region25
    $region24: #{tpu_custom_call.1} parent=1 // pred_region
      %180 = dma.done [#allocation3], 256
    $region25: #{tpu_custom_call.1} parent=1 // pred_fallthru
      _
    %181 = vsyncpa [#allocation3], 1

</llo_original>
